<compile_context>
chip_gen: v6e
topology: v6e:2x2x1
jax: 0.10.0
libtpu: 0.0.40
codegen_flags: <defaults>
</compile_context>

<pallas_src>
import jax
import jax.numpy as jnp
from jax.experimental import pallas as pl
from jax.experimental.pallas import tpu as pltpu

LN_EPS = 1e-5  # torch.nn.LayerNorm default


def _layer_norm(x, eps=LN_EPS):
    # LayerNorm over the last dim, elementwise_affine=False.
    mean = jnp.mean(x, axis=-1, keepdims=True)
    var = jnp.mean(jnp.square(x - mean), axis=-1, keepdims=True)
    return (x - mean) * jax.lax.rsqrt(var + eps)


def _make_resnet_kernel(num_resblocks):
    """Kernel with all resblocks fused; weights stay resident in VMEM."""

    def kernel(x_ref, w1_ref, b1_ref, w2_ref, b2_ref, o_ref):
        x = x_ref[...].astype(jnp.float32)  # (B, D), lives in vregs

        # Static unroll over resblocks (R is a compile-time constant).
        for r in range(num_resblocks):
            shortcut = x

            # --- layer 0: LN -> ReLU -> Linear(D -> H) ---
            h = _layer_norm(x)
            h = jnp.maximum(h, 0.0)
            h = jnp.dot(h, w1_ref[r], preferred_element_type=jnp.float32)
            h = h + b1_ref[pl.ds(r, 1), :]          # (1, H) broadcast over batch

            # --- layer 1: LN -> ReLU -> Linear(H -> D) ---
            h = _layer_norm(h)
            h = jnp.maximum(h, 0.0)
            h = jnp.dot(h, w2_ref[r], preferred_element_type=jnp.float32)
            h = h + b2_ref[pl.ds(r, 1), :]          # (1, D) broadcast over batch

            x = h + shortcut                        # residual

        o_ref[...] = x.astype(o_ref.dtype)          # single store at the end

    return kernel


def resnet_forward(x, w1, b1, w2, b2):
    """x: (B, D); w1: (R, D, H); b1: (R, H); w2: (R, H, D); b2: (R, D)."""
    B, D = x.shape
    R = w1.shape[0]

    vmem_spec = pl.BlockSpec(memory_space=pltpu.MemorySpace.VMEM)

    return pl.pallas_call(
        _make_resnet_kernel(R),
        out_shape=jax.ShapeDtypeStruct((B, D), x.dtype),
        in_specs=[vmem_spec] * 5,
        out_specs=vmem_spec,
        compiler_params=pltpu.CompilerParams(
            # Tiny workload; explicit limit just keeps headroom predictable
            # across v5e/v6e/v7x scoped-VMEM defaults.
            vmem_limit_bytes=32 * 1024 * 1024,
        ),
    )(x, w1, b1, w2, b2)


def resnet_reference(x, w1, b1, w2, b2):
    """Pure-JAX reference matching the PyTorch forward."""
    x = x.astype(jnp.float32)
    for r in range(w1.shape[0]):
        shortcut = x
        h = _layer_norm(x)
        h = jnp.maximum(h, 0.0)
        h = h @ w1[r] + b1[r]
        h = _layer_norm(h)
        h = jnp.maximum(h, 0.0)
        h = h @ w2[r] + b2[r]
        x = h + shortcut
    return x


if __name__ == "__main__":
    # Shapes consistent with the module: Resnet(input_size=32, num_resblocks=3)
    batch = 8
    input_size = 32            # D
    hidden_size = input_size   # Resblock default: hidden_size = input_size
    num_resblocks = 3

    key = jax.random.PRNGKey(0)
    kx, k1, k2 = jax.random.split(key, 3)

    x = jax.random.normal(kx, (batch, input_size), dtype=jnp.float32)

    # _layer_init(std=0.005, bias_value=0): weights ~ N(0, 0.005), bias = 0.
    # Stored as (in, out) so the kernel does x @ W (torch Linear stores (out, in)).
    w1 = 0.005 * jax.random.normal(
        k1, (num_resblocks, input_size, hidden_size), jnp.float32)
    b1 = jnp.zeros((num_resblocks, hidden_size), jnp.float32)
    w2 = 0.005 * jax.random.normal(
        k2, (num_resblocks, hidden_size, input_size), jnp.float32)
    b2 = jnp.zeros((num_resblocks, input_size), jnp.float32)

    out = resnet_forward(x, w1, b1, w2, b2)
    out = jax.block_until_ready(out)

    ref = resnet_reference(x, w1, b1, w2, b2)
    assert out.shape == (batch, input_size)
    assert jnp.allclose(out, ref, atol=1e-4, rtol=1e-4), "mismatch vs reference"

    print("KERNEL_OK")
</pallas_src>

<mosaic_0001>
module attributes {stable_mosaic.version = 11 : i64} {
  func.func @kernel(%arg0: memref<8x32xf32, #tpu.memory_space<vmem>>, %arg1: memref<3x32x32xf32, #tpu.memory_space<vmem>>, %arg2: memref<3x32xf32, #tpu.memory_space<vmem>>, %arg3: memref<3x32x32xf32, #tpu.memory_space<vmem>>, %arg4: memref<3x32xf32, #tpu.memory_space<vmem>>, %arg5: memref<8x32xf32, #tpu.memory_space<vmem>>) attributes {dimension_semantics = [], scalar_prefetch = 0 : i64, scratch_operands = 0 : i64, tpu.core_type = #tpu.core_type<tc>} {
    %c0 = arith.constant 0 : index
    %c0_0 = arith.constant 0 : index
    %0 = vector.load %arg0[%c0, %c0_0] : memref<8x32xf32, #tpu.memory_space<vmem>>, vector<8x32xf32>
    %cst = arith.constant dense<0.000000e+00> : vector<8xf32>
    %1 = vector.multi_reduction <add>, %0, %cst [1] : vector<8x32xf32> to vector<8xf32>
    %2 = vector.shape_cast %1 : vector<8xf32> to vector<8x1xf32>
    %cst_1 = arith.constant 3.200000e+01 : f32
    %3 = vector.broadcast %cst_1 : f32 to vector<8x1xf32>
    %4 = arith.divf %2, %3 : vector<8x1xf32>
    %5 = vector.broadcast %4 : vector<8x1xf32> to vector<8x32xf32>
    %6 = arith.subf %0, %5 : vector<8x32xf32>
    %7 = arith.mulf %6, %6 : vector<8x32xf32>
    %cst_2 = arith.constant dense<0.000000e+00> : vector<8xf32>
    %8 = vector.multi_reduction <add>, %7, %cst_2 [1] : vector<8x32xf32> to vector<8xf32>
    %9 = vector.shape_cast %8 : vector<8xf32> to vector<8x1xf32>
    %cst_3 = arith.constant 3.200000e+01 : f32
    %10 = vector.broadcast %cst_3 : f32 to vector<8x1xf32>
    %11 = arith.divf %9, %10 : vector<8x1xf32>
    %12 = vector.broadcast %4 : vector<8x1xf32> to vector<8x32xf32>
    %13 = arith.subf %0, %12 : vector<8x32xf32>
    %cst_4 = arith.constant 9.99999974E-6 : f32
    %14 = vector.broadcast %cst_4 : f32 to vector<8x1xf32>
    %15 = arith.addf %11, %14 : vector<8x1xf32>
    %16 = math.rsqrt %15 : vector<8x1xf32>
    %17 = vector.broadcast %16 : vector<8x1xf32> to vector<8x32xf32>
    %18 = arith.mulf %13, %17 : vector<8x32xf32>
    %cst_5 = arith.constant 0.000000e+00 : f32
    %19 = vector.broadcast %cst_5 : f32 to vector<8x32xf32>
    %20 = arith.maximumf %18, %19 : vector<8x32xf32>
    %c0_6 = arith.constant 0 : index
    %c0_7 = arith.constant 0 : index
    %c0_8 = arith.constant 0 : index
    %21 = vector.load %arg1[%c0_6, %c0_7, %c0_8] : memref<3x32x32xf32, #tpu.memory_space<vmem>>, vector<1x32x32xf32>
    %22 = vector.shape_cast %21 : vector<1x32x32xf32> to vector<32x32xf32>
    %cst_9 = arith.constant dense<0.000000e+00> : vector<8x32xf32>
    %23 = tpu.matmul %20, %22, %cst_9 {dimension_numbers = #tpu.dot_dimension_numbers<[1], [0], [0], [1], [0, 0, 1, 1], [], []>} : vector<8x32xf32>, vector<32x32xf32>, vector<8x32xf32> -> vector<8x32xf32>
    %c0_10 = arith.constant 0 : index
    %c0_11 = arith.constant 0 : index
    %24 = vector.load %arg2[%c0_10, %c0_11] : memref<3x32xf32, #tpu.memory_space<vmem>>, vector<1x32xf32>
    %25 = vector.broadcast %24 : vector<1x32xf32> to vector<8x32xf32>
    %26 = arith.addf %23, %25 : vector<8x32xf32>
    %cst_12 = arith.constant dense<0.000000e+00> : vector<8xf32>
    %27 = vector.multi_reduction <add>, %26, %cst_12 [1] : vector<8x32xf32> to vector<8xf32>
    %28 = vector.shape_cast %27 : vector<8xf32> to vector<8x1xf32>
    %cst_13 = arith.constant 3.200000e+01 : f32
    %29 = vector.broadcast %cst_13 : f32 to vector<8x1xf32>
    %30 = arith.divf %28, %29 : vector<8x1xf32>
    %31 = vector.broadcast %30 : vector<8x1xf32> to vector<8x32xf32>
    %32 = arith.subf %26, %31 : vector<8x32xf32>
    %33 = arith.mulf %32, %32 : vector<8x32xf32>
    %cst_14 = arith.constant dense<0.000000e+00> : vector<8xf32>
    %34 = vector.multi_reduction <add>, %33, %cst_14 [1] : vector<8x32xf32> to vector<8xf32>
    %35 = vector.shape_cast %34 : vector<8xf32> to vector<8x1xf32>
    %cst_15 = arith.constant 3.200000e+01 : f32
    %36 = vector.broadcast %cst_15 : f32 to vector<8x1xf32>
    %37 = arith.divf %35, %36 : vector<8x1xf32>
    %38 = vector.broadcast %30 : vector<8x1xf32> to vector<8x32xf32>
    %39 = arith.subf %26, %38 : vector<8x32xf32>
    %cst_16 = arith.constant 9.99999974E-6 : f32
    %40 = vector.broadcast %cst_16 : f32 to vector<8x1xf32>
    %41 = arith.addf %37, %40 : vector<8x1xf32>
    %42 = math.rsqrt %41 : vector<8x1xf32>
    %43 = vector.broadcast %42 : vector<8x1xf32> to vector<8x32xf32>
    %44 = arith.mulf %39, %43 : vector<8x32xf32>
    %cst_17 = arith.constant 0.000000e+00 : f32
    %45 = vector.broadcast %cst_17 : f32 to vector<8x32xf32>
    %46 = arith.maximumf %44, %45 : vector<8x32xf32>
    %c0_18 = arith.constant 0 : index
    %c0_19 = arith.constant 0 : index
    %c0_20 = arith.constant 0 : index
    %47 = vector.load %arg3[%c0_18, %c0_19, %c0_20] : memref<3x32x32xf32, #tpu.memory_space<vmem>>, vector<1x32x32xf32>
    %48 = vector.shape_cast %47 : vector<1x32x32xf32> to vector<32x32xf32>
    %cst_21 = arith.constant dense<0.000000e+00> : vector<8x32xf32>
    %49 = tpu.matmul %46, %48, %cst_21 {dimension_numbers = #tpu.dot_dimension_numbers<[1], [0], [0], [1], [0, 0, 1, 1], [], []>} : vector<8x32xf32>, vector<32x32xf32>, vector<8x32xf32> -> vector<8x32xf32>
    %c0_22 = arith.constant 0 : index
    %c0_23 = arith.constant 0 : index
    %50 = vector.load %arg4[%c0_22, %c0_23] : memref<3x32xf32, #tpu.memory_space<vmem>>, vector<1x32xf32>
    %51 = vector.broadcast %50 : vector<1x32xf32> to vector<8x32xf32>
    %52 = arith.addf %49, %51 : vector<8x32xf32>
    %53 = arith.addf %52, %0 : vector<8x32xf32>
    %cst_24 = arith.constant dense<0.000000e+00> : vector<8xf32>
    %54 = vector.multi_reduction <add>, %53, %cst_24 [1] : vector<8x32xf32> to vector<8xf32>
    %55 = vector.shape_cast %54 : vector<8xf32> to vector<8x1xf32>
    %cst_25 = arith.constant 3.200000e+01 : f32
    %56 = vector.broadcast %cst_25 : f32 to vector<8x1xf32>
    %57 = arith.divf %55, %56 : vector<8x1xf32>
    %58 = vector.broadcast %57 : vector<8x1xf32> to vector<8x32xf32>
    %59 = arith.subf %53, %58 : vector<8x32xf32>
    %60 = arith.mulf %59, %59 : vector<8x32xf32>
    %cst_26 = arith.constant dense<0.000000e+00> : vector<8xf32>
    %61 = vector.multi_reduction <add>, %60, %cst_26 [1] : vector<8x32xf32> to vector<8xf32>
    %62 = vector.shape_cast %61 : vector<8xf32> to vector<8x1xf32>
    %cst_27 = arith.constant 3.200000e+01 : f32
    %63 = vector.broadcast %cst_27 : f32 to vector<8x1xf32>
    %64 = arith.divf %62, %63 : vector<8x1xf32>
    %65 = vector.broadcast %57 : vector<8x1xf32> to vector<8x32xf32>
    %66 = arith.subf %53, %65 : vector<8x32xf32>
    %cst_28 = arith.constant 9.99999974E-6 : f32
    %67 = vector.broadcast %cst_28 : f32 to vector<8x1xf32>
    %68 = arith.addf %64, %67 : vector<8x1xf32>
    %69 = math.rsqrt %68 : vector<8x1xf32>
    %70 = vector.broadcast %69 : vector<8x1xf32> to vector<8x32xf32>
    %71 = arith.mulf %66, %70 : vector<8x32xf32>
    %cst_29 = arith.constant 0.000000e+00 : f32
    %72 = vector.broadcast %cst_29 : f32 to vector<8x32xf32>
    %73 = arith.maximumf %71, %72 : vector<8x32xf32>
    %c1 = arith.constant 1 : index
    %c0_30 = arith.constant 0 : index
    %c0_31 = arith.constant 0 : index
    %74 = vector.load %arg1[%c1, %c0_30, %c0_31] : memref<3x32x32xf32, #tpu.memory_space<vmem>>, vector<1x32x32xf32>
    %75 = vector.shape_cast %74 : vector<1x32x32xf32> to vector<32x32xf32>
    %cst_32 = arith.constant dense<0.000000e+00> : vector<8x32xf32>
    %76 = tpu.matmul %73, %75, %cst_32 {dimension_numbers = #tpu.dot_dimension_numbers<[1], [0], [0], [1], [0, 0, 1, 1], [], []>} : vector<8x32xf32>, vector<32x32xf32>, vector<8x32xf32> -> vector<8x32xf32>
    %c1_33 = arith.constant 1 : index
    %c0_34 = arith.constant 0 : index
    %77 = vector.load %arg2[%c1_33, %c0_34] : memref<3x32xf32, #tpu.memory_space<vmem>>, vector<1x32xf32>
    %78 = vector.broadcast %77 : vector<1x32xf32> to vector<8x32xf32>
    %79 = arith.addf %76, %78 : vector<8x32xf32>
    %cst_35 = arith.constant dense<0.000000e+00> : vector<8xf32>
    %80 = vector.multi_reduction <add>, %79, %cst_35 [1] : vector<8x32xf32> to vector<8xf32>
    %81 = vector.shape_cast %80 : vector<8xf32> to vector<8x1xf32>
    %cst_36 = arith.constant 3.200000e+01 : f32
    %82 = vector.broadcast %cst_36 : f32 to vector<8x1xf32>
    %83 = arith.divf %81, %82 : vector<8x1xf32>
    %84 = vector.broadcast %83 : vector<8x1xf32> to vector<8x32xf32>
    %85 = arith.subf %79, %84 : vector<8x32xf32>
    %86 = arith.mulf %85, %85 : vector<8x32xf32>
    %cst_37 = arith.constant dense<0.000000e+00> : vector<8xf32>
    %87 = vector.multi_reduction <add>, %86, %cst_37 [1] : vector<8x32xf32> to vector<8xf32>
    %88 = vector.shape_cast %87 : vector<8xf32> to vector<8x1xf32>
    %cst_38 = arith.constant 3.200000e+01 : f32
    %89 = vector.broadcast %cst_38 : f32 to vector<8x1xf32>
    %90 = arith.divf %88, %89 : vector<8x1xf32>
    %91 = vector.broadcast %83 : vector<8x1xf32> to vector<8x32xf32>
    %92 = arith.subf %79, %91 : vector<8x32xf32>
    %cst_39 = arith.constant 9.99999974E-6 : f32
    %93 = vector.broadcast %cst_39 : f32 to vector<8x1xf32>
    %94 = arith.addf %90, %93 : vector<8x1xf32>
    %95 = math.rsqrt %94 : vector<8x1xf32>
    %96 = vector.broadcast %95 : vector<8x1xf32> to vector<8x32xf32>
    %97 = arith.mulf %92, %96 : vector<8x32xf32>
    %cst_40 = arith.constant 0.000000e+00 : f32
    %98 = vector.broadcast %cst_40 : f32 to vector<8x32xf32>
    %99 = arith.maximumf %97, %98 : vector<8x32xf32>
    %c1_41 = arith.constant 1 : index
    %c0_42 = arith.constant 0 : index
    %c0_43 = arith.constant 0 : index
    %100 = vector.load %arg3[%c1_41, %c0_42, %c0_43] : memref<3x32x32xf32, #tpu.memory_space<vmem>>, vector<1x32x32xf32>
    %101 = vector.shape_cast %100 : vector<1x32x32xf32> to vector<32x32xf32>
    %cst_44 = arith.constant dense<0.000000e+00> : vector<8x32xf32>
    %102 = tpu.matmul %99, %101, %cst_44 {dimension_numbers = #tpu.dot_dimension_numbers<[1], [0], [0], [1], [0, 0, 1, 1], [], []>} : vector<8x32xf32>, vector<32x32xf32>, vector<8x32xf32> -> vector<8x32xf32>
    %c1_45 = arith.constant 1 : index
    %c0_46 = arith.constant 0 : index
    %103 = vector.load %arg4[%c1_45, %c0_46] : memref<3x32xf32, #tpu.memory_space<vmem>>, vector<1x32xf32>
    %104 = vector.broadcast %103 : vector<1x32xf32> to vector<8x32xf32>
    %105 = arith.addf %102, %104 : vector<8x32xf32>
    %106 = arith.addf %105, %53 : vector<8x32xf32>
    %cst_47 = arith.constant dense<0.000000e+00> : vector<8xf32>
    %107 = vector.multi_reduction <add>, %106, %cst_47 [1] : vector<8x32xf32> to vector<8xf32>
    %108 = vector.shape_cast %107 : vector<8xf32> to vector<8x1xf32>
    %cst_48 = arith.constant 3.200000e+01 : f32
    %109 = vector.broadcast %cst_48 : f32 to vector<8x1xf32>
    %110 = arith.divf %108, %109 : vector<8x1xf32>
    %111 = vector.broadcast %110 : vector<8x1xf32> to vector<8x32xf32>
    %112 = arith.subf %106, %111 : vector<8x32xf32>
    %113 = arith.mulf %112, %112 : vector<8x32xf32>
    %cst_49 = arith.constant dense<0.000000e+00> : vector<8xf32>
    %114 = vector.multi_reduction <add>, %113, %cst_49 [1] : vector<8x32xf32> to vector<8xf32>
    %115 = vector.shape_cast %114 : vector<8xf32> to vector<8x1xf32>
    %cst_50 = arith.constant 3.200000e+01 : f32
    %116 = vector.broadcast %cst_50 : f32 to vector<8x1xf32>
    %117 = arith.divf %115, %116 : vector<8x1xf32>
    %118 = vector.broadcast %110 : vector<8x1xf32> to vector<8x32xf32>
    %119 = arith.subf %106, %118 : vector<8x32xf32>
    %cst_51 = arith.constant 9.99999974E-6 : f32
    %120 = vector.broadcast %cst_51 : f32 to vector<8x1xf32>
    %121 = arith.addf %117, %120 : vector<8x1xf32>
    %122 = math.rsqrt %121 : vector<8x1xf32>
    %123 = vector.broadcast %122 : vector<8x1xf32> to vector<8x32xf32>
    %124 = arith.mulf %119, %123 : vector<8x32xf32>
    %cst_52 = arith.constant 0.000000e+00 : f32
    %125 = vector.broadcast %cst_52 : f32 to vector<8x32xf32>
    %126 = arith.maximumf %124, %125 : vector<8x32xf32>
    %c2 = arith.constant 2 : index
    %c0_53 = arith.constant 0 : index
    %c0_54 = arith.constant 0 : index
    %127 = vector.load %arg1[%c2, %c0_53, %c0_54] : memref<3x32x32xf32, #tpu.memory_space<vmem>>, vector<1x32x32xf32>
    %128 = vector.shape_cast %127 : vector<1x32x32xf32> to vector<32x32xf32>
    %cst_55 = arith.constant dense<0.000000e+00> : vector<8x32xf32>
    %129 = tpu.matmul %126, %128, %cst_55 {dimension_numbers = #tpu.dot_dimension_numbers<[1], [0], [0], [1], [0, 0, 1, 1], [], []>} : vector<8x32xf32>, vector<32x32xf32>, vector<8x32xf32> -> vector<8x32xf32>
    %c2_56 = arith.constant 2 : index
    %c0_57 = arith.constant 0 : index
    %130 = vector.load %arg2[%c2_56, %c0_57] : memref<3x32xf32, #tpu.memory_space<vmem>>, vector<1x32xf32>
    %131 = vector.broadcast %130 : vector<1x32xf32> to vector<8x32xf32>
    %132 = arith.addf %129, %131 : vector<8x32xf32>
    %cst_58 = arith.constant dense<0.000000e+00> : vector<8xf32>
    %133 = vector.multi_reduction <add>, %132, %cst_58 [1] : vector<8x32xf32> to vector<8xf32>
    %134 = vector.shape_cast %133 : vector<8xf32> to vector<8x1xf32>
    %cst_59 = arith.constant 3.200000e+01 : f32
    %135 = vector.broadcast %cst_59 : f32 to vector<8x1xf32>
    %136 = arith.divf %134, %135 : vector<8x1xf32>
    %137 = vector.broadcast %136 : vector<8x1xf32> to vector<8x32xf32>
    %138 = arith.subf %132, %137 : vector<8x32xf32>
    %139 = arith.mulf %138, %138 : vector<8x32xf32>
    %cst_60 = arith.constant dense<0.000000e+00> : vector<8xf32>
    %140 = vector.multi_reduction <add>, %139, %cst_60 [1] : vector<8x32xf32> to vector<8xf32>
    %141 = vector.shape_cast %140 : vector<8xf32> to vector<8x1xf32>
    %cst_61 = arith.constant 3.200000e+01 : f32
    %142 = vector.broadcast %cst_61 : f32 to vector<8x1xf32>
    %143 = arith.divf %141, %142 : vector<8x1xf32>
    %144 = vector.broadcast %136 : vector<8x1xf32> to vector<8x32xf32>
    %145 = arith.subf %132, %144 : vector<8x32xf32>
    %cst_62 = arith.constant 9.99999974E-6 : f32
    %146 = vector.broadcast %cst_62 : f32 to vector<8x1xf32>
    %147 = arith.addf %143, %146 : vector<8x1xf32>
    %148 = math.rsqrt %147 : vector<8x1xf32>
    %149 = vector.broadcast %148 : vector<8x1xf32> to vector<8x32xf32>
    %150 = arith.mulf %145, %149 : vector<8x32xf32>
    %cst_63 = arith.constant 0.000000e+00 : f32
    %151 = vector.broadcast %cst_63 : f32 to vector<8x32xf32>
    %152 = arith.maximumf %150, %151 : vector<8x32xf32>
    %c2_64 = arith.constant 2 : index
    %c0_65 = arith.constant 0 : index
    %c0_66 = arith.constant 0 : index
    %153 = vector.load %arg3[%c2_64, %c0_65, %c0_66] : memref<3x32x32xf32, #tpu.memory_space<vmem>>, vector<1x32x32xf32>
    %154 = vector.shape_cast %153 : vector<1x32x32xf32> to vector<32x32xf32>
    %cst_67 = arith.constant dense<0.000000e+00> : vector<8x32xf32>
    %155 = tpu.matmul %152, %154, %cst_67 {dimension_numbers = #tpu.dot_dimension_numbers<[1], [0], [0], [1], [0, 0, 1, 1], [], []>} : vector<8x32xf32>, vector<32x32xf32>, vector<8x32xf32> -> vector<8x32xf32>
    %c2_68 = arith.constant 2 : index
    %c0_69 = arith.constant 0 : index
    %156 = vector.load %arg4[%c2_68, %c0_69] : memref<3x32xf32, #tpu.memory_space<vmem>>, vector<1x32xf32>
    %157 = vector.broadcast %156 : vector<1x32xf32> to vector<8x32xf32>
    %158 = arith.addf %155, %157 : vector<8x32xf32>
    %159 = arith.addf %158, %106 : vector<8x32xf32>
    %c0_70 = arith.constant 0 : index
    %c0_71 = arith.constant 0 : index
    %160 = vector.load %arg5[%c0_70, %c0_71] : memref<8x32xf32, #tpu.memory_space<vmem>>, vector<8x32xf32>
    tpu.vector_store %arg5[%c0_70, %c0_71], %159 {strides = array<i32>} : memref<8x32xf32, #tpu.memory_space<vmem>>, vector<8x32xf32>,
    return
  }
}

</mosaic_0001>

<llo_original>
// kernel: tpu_custom_call.1
$region0: #{tpu_custom_call.1}
  #allocation0 [shape = 'u32[]', space=smem, size = 0x4, offset = 0x4, fixed_abs, tag = 'smem constant byte address 0x4 - core index']
  #allocation1 [shape = 'u32[144,128]{1,0:T(1,128)}', space=vmem, size = 0x12000, scoped, tag = 'internal scratch']
  %s0 = inlined_call_operand.hbm [shape: f32[8,32], index: 0, kind: input, shape index: {}]
  %s1 = inlined_call_operand.hbm [shape: f32[3,32,32], index: 1, kind: input, shape index: {}]
  %s2 = inlined_call_operand.hbm [shape: f32[3,32], index: 2, kind: input, shape index: {}]
  %s3 = inlined_call_operand.hbm [shape: f32[3,32,32], index: 3, kind: input, shape index: {}]
  %s4 = inlined_call_operand.vmem [shape: f32[3,32], index: 4, kind: input, shape index: {}]
  %s5 = inlined_call_operand.hbm [shape: f32[8,32], index: 5, kind: output, shape index: {}]
  %s6 = sld [smem:[#allocation0]]
  $region46: #{tpu_custom_call.1} parent=0
    _
  %s8 = ssub.s32 1, %s6
  %s9 = scalar_select 0, %s8, %s6
  $region1: #{tpu_custom_call.1} parent=0
    #allocation2 [shape = 'u8[4096]{0}', space=vmem, size = 0x1000, scoped, tag = 'input window, operand 0, single buffered']
    #allocation3 [shape = 's32[1]{0}', space=sflag, size = 0x4, scoped, tag = 'scoped memory for tpu_custom_call.1']
    #allocation4 [shape = 's32[1]{0}', space=sflag, size = 0x4, scoped, tag = 'scoped memory for tpu_custom_call.1']
    #allocation5 [shape = 'u8[49152]{0}', space=vmem, size = 0xc000, scoped, tag = 'input window, operand 1, single buffered']
    #allocation6 [shape = 's32[1]{0}', space=sflag, size = 0x4, scoped, tag = 'scoped memory for tpu_custom_call.1']
    #allocation7 [shape = 'u8[2048]{0}', space=vmem, size = 0x800, scoped, tag = 'input window, operand 2, single buffered']
    #allocation8 [shape = 'u8[49152]{0}', space=vmem, size = 0xc000, scoped, tag = 'input window, operand 3, single buffered']
    #allocation9 [shape = 's32[1]{0}', space=sflag, size = 0x4, scoped, tag = 'scoped memory for tpu_custom_call.1']
    #allocation10 [shape = 'u8[4096]{0}', space=vmem, size = 0x1000, scoped, tag = 'output window, operand 0, single buffered']
    %10 = vsyncpa [#allocation3], 0
    %11 = vsyncpa [#allocation6], 0
    %12 = vsyncpa [#allocation9], 0
    %13 = vsyncpa [#allocation4], 0
    // Predicated region
    $region2: #{tpu_custom_call.1} parent=1 // pred_check
      _
    $region3: #{tpu_custom_call.1} parent=1 // pred_check_branch
      %15 = sbr.rel (0) target = $region5
    $region4: #{tpu_custom_call.1} parent=1 // pred_region
      %s17 = ssub.s32 128, 128
      %18 = vsyncadd [#allocation3], %s17
      %s20 = sshll.u32 [#allocation2], 4
      %s21 = int_to_ptr.vmem [resolvable:$true] %s20
      %23 = dma.hbm_to_vmem [thread:$0]  %s0, 128, %s21, [#allocation3]
    $region5: #{tpu_custom_call.1} parent=1 // pred_fallthru
      _
    // Predicated region
    $region6: #{tpu_custom_call.1} parent=1 // pred_check
      _
    $region7: #{tpu_custom_call.1} parent=1 // pred_check_branch
      %25 = sbr.rel (0) target = $region9
    $region8: #{tpu_custom_call.1} parent=1 // pred_region
      %s27 = ssub.s32 1536, 1536
      %28 = vsyncadd [#allocation6], %s27
      %s29 = sshll.u32 [#allocation5], 4
      %s30 = int_to_ptr.vmem [resolvable:$true] %s29
      %35 = dma.hbm_to_vmem [thread:$0]  %s1, 1536, %s30, [#allocation6], 128, 128, 8
    $region9: #{tpu_custom_call.1} parent=1 // pred_fallthru
      _
    // Predicated region
    $region10: #{tpu_custom_call.1} parent=1 // pred_check
      _
    $region11: #{tpu_custom_call.1} parent=1 // pred_check_branch
      %37 = sbr.rel (0) target = $region13
    $region12: #{tpu_custom_call.1} parent=1 // pred_region
      %s39 = ssub.s32 64, 64
      %40 = vsyncadd [#allocation6], %s39
      %s42 = sshll.u32 [#allocation7], 4
      %s43 = int_to_ptr.vmem [resolvable:$true] %s42
      %45 = dma.hbm_to_vmem [thread:$0]  %s2, 64, %s43, [#allocation6]
    $region13: #{tpu_custom_call.1} parent=1 // pred_fallthru
      _
    // Predicated region
    $region14: #{tpu_custom_call.1} parent=1 // pred_check
      _
    $region15: #{tpu_custom_call.1} parent=1 // pred_check_branch
      %47 = sbr.rel (0) target = $region17
    $region16: #{tpu_custom_call.1} parent=1 // pred_region
      %s49 = ssub.s32 1536, 1536
      %50 = vsyncadd [#allocation9], %s49
      %s51 = sshll.u32 [#allocation8], 4
      %s52 = int_to_ptr.vmem [resolvable:$true] %s51
      %57 = dma.hbm_to_vmem [thread:$0]  %s3, 1536, %s52, [#allocation9], 128, 128, 8
    $region17: #{tpu_custom_call.1} parent=1 // pred_fallthru
      _
    // Predicated region
    $region18: #{tpu_custom_call.1} parent=1 // pred_check
      _
    $region19: #{tpu_custom_call.1} parent=1 // pred_check_branch
      %59 = sbr.rel (0) target = $region21
    $region20: #{tpu_custom_call.1} parent=1 // pred_region
      _
    $region21: #{tpu_custom_call.1} parent=1 // pred_fallthru
      _
    // Predicated region
    $region22: #{tpu_custom_call.1} parent=1 // pred_check
      _
    $region23: #{tpu_custom_call.1} parent=1 // pred_check_branch
      %61 = sbr.rel (0) target = $region25
    $region24: #{tpu_custom_call.1} parent=1 // pred_region
      %62 = dma.done [#allocation3], 128
    $region25: #{tpu_custom_call.1} parent=1 // pred_fallthru
      _
    // Predicated region
    $region26: #{tpu_custom_call.1} parent=1 // pred_check
      _
    $region27: #{tpu_custom_call.1} parent=1 // pred_check_branch
      %64 = sbr.rel (0) target = $region29
    $region28: #{tpu_custom_call.1} parent=1 // pred_region
      %65 = dma.done [#allocation6], 1536
    $region29: #{tpu_custom_call.1} parent=1 // pred_fallthru
      _
    // Predicated region
    $region30: #{tpu_custom_call.1} parent=1 // pred_check
      _
    $region31: #{tpu_custom_call.1} parent=1 // pred_check_branch
      %67 = sbr.rel (0) target = $region33
    $region32: #{tpu_custom_call.1} parent=1 // pred_region
      %68 = dma.done [#allocation6], 64
    $region33: #{tpu_custom_call.1} parent=1 // pred_fallthru
      _
    // Predicated region
    $region34: #{tpu_custom_call.1} parent=1 // pred_check
      _
    $region35: #{tpu_custom_call.1} parent=1 // pred_check_branch
      %70 = sbr.rel (0) target = $region37
    $region36: #{tpu_custom_call.1} parent=1 // pred_region
      %71 = dma.done [#allocation9], 1536
    $region37: #{tpu_custom_call.1} parent=1 // pred_fallthru
      _
    %v72 = vld [vmem:[#allocation2] sm:$0xff]
    %vm73 = vcmask 261120
    %v74 = vsel %vm73, %v72, 0.0
    %75 = vadd.xlane.f32.xlu0 %v74
    %v76 = vpop.xlane.xlu0 %75
    %v77 = vrcp.pop 32.0
    %v78 = vmul.f32 %v76, %v77
    %v79 = vsub.f32 %v72, %v78
    %v80 = vmul.f32 %v79, %v79
    %v81 = vsel %vm73, %v80, 0.0
    %82 = vadd.xlane.f32.xlu0 %v81
    %v83 = vpop.xlane.xlu0 %82
    %v84 = vmul.f32 %v83, %v77
    %v85 = vadd.f32 %v84, 1e-05
    %v86 = vrsqrt.pop %v85
    %v87 = vmul.f32 %v79, %v86
    %v88 = vmax.f32 %v87, 0.0
    %v89 = vld [vmem:[#allocation5] sm:$0xff]
    %v90 = vld [vmem:[#allocation5 + $0x8] sm:$0xff]
    %v91 = vld [vmem:[#allocation5 + $0x10] sm:$0xff]
    %v92 = vld [vmem:[#allocation5 + $0x18] sm:$0xff]
    %v93 = vld [vmem:[#allocation7] sm:$0x1]
    %v94 = vlaneseq
    %v95 = vshrl.u32 %v94, 7
    %v96 = vsub.s32 0, %v95
    %v97 = vrot.slane %v93, %v96
    %v99 = vsel %vm73, %v88, 0
    %101 = vmatprep.subr.mxu0 0.0
    %102 = vmatpush1.msra.mxu0 0.0
    %103 = vmatprep.subr.mxu0 0.0
    %104 = vmatpush1.msra.mxu0 0.0
    %105 = vmatprep.subr.mxu0 0.0
    %106 = vmatpush1.msra.mxu0 0.0
    %107 = vmatprep.subr.mxu0 0.0
    %108 = vmatpush1.msra.mxu0 0.0
    %109 = vmatprep.subr.mxu0 0.0
    %110 = vmatpush1.msra.mxu0 0.0
    %111 = vmatprep.subr.mxu0 0.0
    %112 = vmatpush1.msra.mxu0 0.0
    %113 = vmatprep.subr.mxu0 0.0
    %114 = vmatpush1.msra.mxu0 0.0
    %115 = vmatprep.subr.mxu0 0.0
    %116 = vmatpush1.msra.mxu0 0.0
    %117 = vmatprep.subr.mxu0 0.0
    %118 = vmatpush1.msra.mxu0 0.0
    %119 = vmatprep.subr.mxu0 0.0
    %120 = vmatpush1.msra.mxu0 0.0
    %121 = vmatprep.subr.mxu0 0.0
    %122 = vmatpush1.msra.mxu0 0.0
    %123 = vmatprep.subr.mxu0 0.0
    %124 = vmatpush1.msra.mxu0 0.0
    %125 = vmatprep.subr.mxu0 0.0
    %126 = vmatpush1.msra.mxu0 %v92
    %127 = vmatprep.subr.mxu0 0.0
    %128 = vmatpush1.msra.mxu0 %v91
    %129 = vmatprep.subr.mxu0 0.0
    %130 = vmatpush1.msra.mxu0 %v90
    %131 = vmatprep.subr.mxu0 0.0
    %132 = vmatpush1.msra.mxu0 %v89
    %133 = vmatprep.subr.mxu0 0.0
    %134 = vmatpush2.msra.mxu0 0.0
    %135 = vmatprep.subr.mxu0 0.0
    %136 = vmatpush2.msra.mxu0 0.0
    %137 = vmatprep.subr.mxu0 0.0
    %138 = vmatpush2.msra.mxu0 0.0
    %139 = vmatprep.subr.mxu0 0.0
    %140 = vmatpush2.msra.mxu0 0.0
    %141 = vmatprep.subr.mxu0 0.0
    %142 = vmatpush2.msra.mxu0 0.0
    %143 = vmatprep.subr.mxu0 0.0
    %144 = vmatpush2.msra.mxu0 0.0
    %145 = vmatprep.subr.mxu0 0.0
    %146 = vmatpush2.msra.mxu0 0.0
    %147 = vmatprep.subr.mxu0 0.0
    %148 = vmatpush2.msra.mxu0 0.0
    %149 = vmatprep.subr.mxu0 0.0
    %150 = vmatpush2.msra.mxu0 0.0
    %151 = vmatprep.subr.mxu0 0.0
    %152 = vmatpush2.msra.mxu0 0.0
    %153 = vmatprep.subr.mxu0 0.0
    %154 = vmatpush2.msra.mxu0 0.0
    %155 = vmatprep.subr.mxu0 0.0
    %156 = vmatpush2.msra.mxu0 0.0
    %157 = vmatprep.subr.mxu0 0.0
    %158 = vmatpush2.msra.mxu0 0.0
    %159 = vmatprep.subr.mxu0 0.0
    %160 = vmatpush2.msra.mxu0 0.0
    %161 = vmatprep.subr.mxu0 0.0
    %162 = vmatpush2.msra.mxu0 0.0
    %163 = vmatprep.subr.mxu0 0.0
    %164 = vmatpush2.msra.mxu0 0.0
    %165 = vmatprep.mubr.f32.mxu0 0.0
    %166 = vmatmul.mubr.f32.gmra.mxu0 %v99
    %v167 = vpop.f32.mrf.mxu0
    %v168 = vadd.f32 %v97, %v167
    %v169 = vpop.f32.mrf.mxu0
    %170 = vdwg.mxu0
    %v171 = vsel %vm73, %v168, 0.0
    %172 = vadd.xlane.f32.xlu0 %v171
    %v173 = vpop.xlane.xlu0 %172
    %v174 = vmul.f32 %v173, %v77
    %v175 = vsub.f32 %v168, %v174
    %v176 = vmul.f32 %v175, %v175
    %v177 = vsel %vm73, %v176, 0.0
    %178 = vadd.xlane.f32.xlu0 %v177
    %v179 = vpop.xlane.xlu0 %178
    %v180 = vmul.f32 %v179, %v77
    %v181 = vadd.f32 %v180, 1e-05
    %v182 = vrsqrt.pop %v181
    %v183 = vmul.f32 %v175, %v182
    %v184 = vmax.f32 %v183, 0.0
    %v185 = vld [vmem:[#allocation8] sm:$0xff]
    %v186 = vld [vmem:[#allocation8 + $0x8] sm:$0xff]
    %v187 = vld [vmem:[#allocation8 + $0x10] sm:$0xff]
    %v188 = vld [vmem:[#allocation8 + $0x18] sm:$0xff]
    %v189 = vld [vmem:[%s4] sm:$0x1]
    %v190 = vlaneseq
    %v191 = vshrl.u32 %v190, 7
    %v192 = vsub.s32 0, %v191
    %v193 = vrot.slane %v189, %v192
    %v195 = vsel %vm73, %v184, 0
    %197 = vmatprep.subr.mxu0 0.0
    %198 = vmatpush1.msra.mxu0 0.0
    %199 = vmatprep.subr.mxu0 0.0
    %200 = vmatpush1.msra.mxu0 0.0
    %201 = vmatprep.subr.mxu0 0.0
    %202 = vmatpush1.msra.mxu0 0.0
    %203 = vmatprep.subr.mxu0 0.0
    %204 = vmatpush1.msra.mxu0 0.0
    %205 = vmatprep.subr.mxu0 0.0
    %206 = vmatpush1.msra.mxu0 0.0
    %207 = vmatprep.subr.mxu0 0.0
    %208 = vmatpush1.msra.mxu0 0.0
    %209 = vmatprep.subr.mxu0 0.0
    %210 = vmatpush1.msra.mxu0 0.0
    %211 = vmatprep.subr.mxu0 0.0
    %212 = vmatpush1.msra.mxu0 0.0
    %213 = vmatprep.subr.mxu0 0.0
    %214 = vmatpush1.msra.mxu0 0.0
    %215 = vmatprep.subr.mxu0 0.0
    %216 = vmatpush1.msra.mxu0 0.0
    %217 = vmatprep.subr.mxu0 0.0
    %218 = vmatpush1.msra.mxu0 0.0
    %219 = vmatprep.subr.mxu0 0.0
    %220 = vmatpush1.msra.mxu0 0.0
    %221 = vmatprep.subr.mxu0 0.0
    %222 = vmatpush1.msra.mxu0 %v188
    %223 = vmatprep.subr.mxu0 0.0
    %224 = vmatpush1.msra.mxu0 %v187
    %225 = vmatprep.subr.mxu0 0.0
    %226 = vmatpush1.msra.mxu0 %v186
    %227 = vmatprep.subr.mxu0 0.0
    %228 = vmatpush1.msra.mxu0 %v185
    %229 = vmatprep.subr.mxu0 0.0
    %230 = vmatpush2.msra.mxu0 0.0
    %231 = vmatprep.subr.mxu0 0.0
    %232 = vmatpush2.msra.mxu0 0.0
    %233 = vmatprep.subr.mxu0 0.0
    %234 = vmatpush2.msra.mxu0 0.0
    %235 = vmatprep.subr.mxu0 0.0
    %236 = vmatpush2.msra.mxu0 0.0
    %237 = vmatprep.subr.mxu0 0.0
    %238 = vmatpush2.msra.mxu0 0.0
    %239 = vmatprep.subr.mxu0 0.0
    %240 = vmatpush2.msra.mxu0 0.0
    %241 = vmatprep.subr.mxu0 0.0
    %242 = vmatpush2.msra.mxu0 0.0
    %243 = vmatprep.subr.mxu0 0.0
    %244 = vmatpush2.msra.mxu0 0.0
    %245 = vmatprep.subr.mxu0 0.0
    %246 = vmatpush2.msra.mxu0 0.0
    %247 = vmatprep.subr.mxu0 0.0
    %248 = vmatpush2.msra.mxu0 0.0
    %249 = vmatprep.subr.mxu0 0.0
    %250 = vmatpush2.msra.mxu0 0.0
    %251 = vmatprep.subr.mxu0 0.0
    %252 = vmatpush2.msra.mxu0 0.0
    %253 = vmatprep.subr.mxu0 0.0
    %254 = vmatpush2.msra.mxu0 0.0
    %255 = vmatprep.subr.mxu0 0.0
    %256 = vmatpush2.msra.mxu0 0.0
    %257 = vmatprep.subr.mxu0 0.0
    %258 = vmatpush2.msra.mxu0 0.0
    %259 = vmatprep.subr.mxu0 0.0
    %260 = vmatpush2.msra.mxu0 0.0
    %261 = vmatprep.mubr.f32.mxu0 0.0
    %262 = vmatmul.mubr.f32.gmra.mxu0 %v195
    %v263 = vpop.f32.mrf.mxu0
    %v264 = vadd.f32 %v193, %v263
    %v265 = vpop.f32.mrf.mxu0
    %266 = vdwg.mxu0
    %v267 = vadd.f32 %v264, %v72
    %v268 = vsel %vm73, %v267, 0.0
    %269 = vadd.xlane.f32.xlu0 %v268
    %v270 = vpop.xlane.xlu0 %269
    %v271 = vmul.f32 %v270, %v77
    %v272 = vsub.f32 %v267, %v271
    %v273 = vmul.f32 %v272, %v272
    %v274 = vsel %vm73, %v273, 0.0
    %275 = vadd.xlane.f32.xlu0 %v274
    %v276 = vpop.xlane.xlu0 %275
    %v277 = vmul.f32 %v276, %v77
    %v278 = vadd.f32 %v277, 1e-05
    %v279 = vrsqrt.pop %v278
    %v280 = vmul.f32 %v272, %v279
    %v281 = vmax.f32 %v280, 0.0
    %s282 = scalar_lea.vmem [#allocation5], 32
    %v283 = vld [vmem:[%s282] sm:$0xff]
    %v284 = vld [vmem:[%s282 + $0x8] sm:$0xff]
    %v285 = vld [vmem:[%s282 + $0x10] sm:$0xff]
    %v286 = vld [vmem:[%s282 + $0x18] sm:$0xff]
    %v287 = vld [vmem:[#allocation7 + $0x1] sm:$0x1]
    %v288 = vlaneseq
    %v289 = vshrl.u32 %v288, 7
    %v290 = vsub.s32 0, %v289
    %v291 = vrot.slane %v287, %v290
    %v293 = vsel %vm73, %v281, 0
    %295 = vmatprep.subr.mxu0 0.0
    %296 = vmatpush1.msra.mxu0 0.0
    %297 = vmatprep.subr.mxu0 0.0
    %298 = vmatpush1.msra.mxu0 0.0
    %299 = vmatprep.subr.mxu0 0.0
    %300 = vmatpush1.msra.mxu0 0.0
    %301 = vmatprep.subr.mxu0 0.0
    %302 = vmatpush1.msra.mxu0 0.0
    %303 = vmatprep.subr.mxu0 0.0
    %304 = vmatpush1.msra.mxu0 0.0
    %305 = vmatprep.subr.mxu0 0.0
    %306 = vmatpush1.msra.mxu0 0.0
    %307 = vmatprep.subr.mxu0 0.0
    %308 = vmatpush1.msra.mxu0 0.0
    %309 = vmatprep.subr.mxu0 0.0
    %310 = vmatpush1.msra.mxu0 0.0
    %311 = vmatprep.subr.mxu0 0.0
    %312 = vmatpush1.msra.mxu0 0.0
    %313 = vmatprep.subr.mxu0 0.0
    %314 = vmatpush1.msra.mxu0 0.0
    %315 = vmatprep.subr.mxu0 0.0
    %316 = vmatpush1.msra.mxu0 0.0
    %317 = vmatprep.subr.mxu0 0.0
    %318 = vmatpush1.msra.mxu0 0.0
    %319 = vmatprep.subr.mxu0 0.0
    %320 = vmatpush1.msra.mxu0 %v286
    %321 = vmatprep.subr.mxu0 0.0
    %322 = vmatpush1.msra.mxu0 %v285
    %323 = vmatprep.subr.mxu0 0.0
    %324 = vmatpush1.msra.mxu0 %v284
    %325 = vmatprep.subr.mxu0 0.0
    %326 = vmatpush1.msra.mxu0 %v283
    %327 = vmatprep.subr.mxu0 0.0
    %328 = vmatpush2.msra.mxu0 0.0
    %329 = vmatprep.subr.mxu0 0.0
    %330 = vmatpush2.msra.mxu0 0.0
    %331 = vmatprep.subr.mxu0 0.0
    %332 = vmatpush2.msra.mxu0 0.0
    %333 = vmatprep.subr.mxu0 0.0
    %334 = vmatpush2.msra.mxu0 0.0
    %335 = vmatprep.subr.mxu0 0.0
    %336 = vmatpush2.msra.mxu0 0.0
    %337 = vmatprep.subr.mxu0 0.0
    %338 = vmatpush2.msra.mxu0 0.0
    %339 = vmatprep.subr.mxu0 0.0
    %340 = vmatpush2.msra.mxu0 0.0
    %341 = vmatprep.subr.mxu0 0.0
    %342 = vmatpush2.msra.mxu0 0.0
    %343 = vmatprep.subr.mxu0 0.0
    %344 = vmatpush2.msra.mxu0 0.0
    %345 = vmatprep.subr.mxu0 0.0
    %346 = vmatpush2.msra.mxu0 0.0
    %347 = vmatprep.subr.mxu0 0.0
    %348 = vmatpush2.msra.mxu0 0.0
    %349 = vmatprep.subr.mxu0 0.0
    %350 = vmatpush2.msra.mxu0 0.0
    %351 = vmatprep.subr.mxu0 0.0
    %352 = vmatpush2.msra.mxu0 0.0
    %353 = vmatprep.subr.mxu0 0.0
    %354 = vmatpush2.msra.mxu0 0.0
    %355 = vmatprep.subr.mxu0 0.0
    %356 = vmatpush2.msra.mxu0 0.0
    %357 = vmatprep.subr.mxu0 0.0
    %358 = vmatpush2.msra.mxu0 0.0
    %359 = vmatprep.mubr.f32.mxu0 0.0
    %360 = vmatmul.mubr.f32.gmra.mxu0 %v293
    %v361 = vpop.f32.mrf.mxu0
    %v362 = vadd.f32 %v291, %v361
    %v363 = vpop.f32.mrf.mxu0
    %364 = vdwg.mxu0
    %v365 = vsel %vm73, %v362, 0.0
    %366 = vadd.xlane.f32.xlu0 %v365
    %v367 = vpop.xlane.xlu0 %366
    %v368 = vmul.f32 %v367, %v77
    %v369 = vsub.f32 %v362, %v368
    %v370 = vmul.f32 %v369, %v369
    %v371 = vsel %vm73, %v370, 0.0
    %372 = vadd.xlane.f32.xlu0 %v371
    %v373 = vpop.xlane.xlu0 %372
    %v374 = vmul.f32 %v373, %v77
    %v375 = vadd.f32 %v374, 1e-05
    %v376 = vrsqrt.pop %v375
    %v377 = vmul.f32 %v369, %v376
    %v378 = vmax.f32 %v377, 0.0
    %s379 = scalar_lea.vmem [#allocation8], 32
    %v380 = vld [vmem:[%s379] sm:$0xff]
    %v381 = vld [vmem:[%s379 + $0x8] sm:$0xff]
    %v382 = vld [vmem:[%s379 + $0x10] sm:$0xff]
    %v383 = vld [vmem:[%s379 + $0x18] sm:$0xff]
    %v384 = vld [vmem:[%s4 + $0x1] sm:$0x1]
    %v385 = vlaneseq
    %v386 = vshrl.u32 %v385, 7
    %v387 = vsub.s32 0, %v386
    %v388 = vrot.slane %v384, %v387
    %v390 = vsel %vm73, %v378, 0
    %392 = vmatprep.subr.mxu0 0.0
    %393 = vmatpush1.msra.mxu0 0.0
    %394 = vmatprep.subr.mxu0 0.0
    %395 = vmatpush1.msra.mxu0 0.0
    %396 = vmatprep.subr.mxu0 0.0
    %397 = vmatpush1.msra.mxu0 0.0
    %398 = vmatprep.subr.mxu0 0.0
    %399 = vmatpush1.msra.mxu0 0.0
    %400 = vmatprep.subr.mxu0 0.0
    %401 = vmatpush1.msra.mxu0 0.0
    %402 = vmatprep.subr.mxu0 0.0
    %403 = vmatpush1.msra.mxu0 0.0
    %404 = vmatprep.subr.mxu0 0.0
    %405 = vmatpush1.msra.mxu0 0.0
    %406 = vmatprep.subr.mxu0 0.0
    %407 = vmatpush1.msra.mxu0 0.0
    %408 = vmatprep.subr.mxu0 0.0
    %409 = vmatpush1.msra.mxu0 0.0
    %410 = vmatprep.subr.mxu0 0.0
    %411 = vmatpush1.msra.mxu0 0.0
    %412 = vmatprep.subr.mxu0 0.0
    %413 = vmatpush1.msra.mxu0 0.0
    %414 = vmatprep.subr.mxu0 0.0
    %415 = vmatpush1.msra.mxu0 0.0
    %416 = vmatprep.subr.mxu0 0.0
    %417 = vmatpush1.msra.mxu0 %v383
    %418 = vmatprep.subr.mxu0 0.0
    %419 = vmatpush1.msra.mxu0 %v382
    %420 = vmatprep.subr.mxu0 0.0
    %421 = vmatpush1.msra.mxu0 %v381
    %422 = vmatprep.subr.mxu0 0.0
    %423 = vmatpush1.msra.mxu0 %v380
    %424 = vmatprep.subr.mxu0 0.0
    %425 = vmatpush2.msra.mxu0 0.0
    %426 = vmatprep.subr.mxu0 0.0
    %427 = vmatpush2.msra.mxu0 0.0
    %428 = vmatprep.subr.mxu0 0.0
    %429 = vmatpush2.msra.mxu0 0.0
    %430 = vmatprep.subr.mxu0 0.0
    %431 = vmatpush2.msra.mxu0 0.0
    %432 = vmatprep.subr.mxu0 0.0
    %433 = vmatpush2.msra.mxu0 0.0
    %434 = vmatprep.subr.mxu0 0.0
    %435 = vmatpush2.msra.mxu0 0.0
    %436 = vmatprep.subr.mxu0 0.0
    %437 = vmatpush2.msra.mxu0 0.0
    %438 = vmatprep.subr.mxu0 0.0
    %439 = vmatpush2.msra.mxu0 0.0
    %440 = vmatprep.subr.mxu0 0.0
    %441 = vmatpush2.msra.mxu0 0.0
    %442 = vmatprep.subr.mxu0 0.0
    %443 = vmatpush2.msra.mxu0 0.0
    %444 = vmatprep.subr.mxu0 0.0
    %445 = vmatpush2.msra.mxu0 0.0
    %446 = vmatprep.subr.mxu0 0.0
    %447 = vmatpush2.msra.mxu0 0.0
    %448 = vmatprep.subr.mxu0 0.0
    %449 = vmatpush2.msra.mxu0 0.0
    %450 = vmatprep.subr.mxu0 0.0
    %451 = vmatpush2.msra.mxu0 0.0
    %452 = vmatprep.subr.mxu0 0.0
    %453 = vmatpush2.msra.mxu0 0.0
    %454 = vmatprep.subr.mxu0 0.0
    %455 = vmatpush2.msra.mxu0 0.0
    %456 = vmatprep.mubr.f32.mxu0 0.0
    %457 = vmatmul.mubr.f32.gmra.mxu0 %v390
    %v458 = vpop.f32.mrf.mxu0
    %v459 = vadd.f32 %v388, %v458
    %v460 = vpop.f32.mrf.mxu0
    %461 = vdwg.mxu0
    %v462 = vadd.f32 %v459, %v267
    %v463 = vsel %vm73, %v462, 0.0
    %464 = vadd.xlane.f32.xlu0 %v463
    %v465 = vpop.xlane.xlu0 %464
    %v466 = vmul.f32 %v465, %v77
    %v467 = vsub.f32 %v462, %v466
    %v468 = vmul.f32 %v467, %v467
    %v469 = vsel %vm73, %v468, 0.0
    %470 = vadd.xlane.f32.xlu0 %v469
    %v471 = vpop.xlane.xlu0 %470
    %v472 = vmul.f32 %v471, %v77
    %v473 = vadd.f32 %v472, 1e-05
    %v474 = vrsqrt.pop %v473
    %v475 = vmul.f32 %v467, %v474
    %v476 = vmax.f32 %v475, 0.0
    %s477 = scalar_lea.vmem [#allocation5], 64
    %v478 = vld [vmem:[%s477] sm:$0xff]
    %v479 = vld [vmem:[%s477 + $0x8] sm:$0xff]
    %v480 = vld [vmem:[%s477 + $0x10] sm:$0xff]
    %v481 = vld [vmem:[%s477 + $0x18] sm:$0xff]
    %v482 = vld [vmem:[#allocation7 + $0x2] sm:$0x1]
    %v483 = vlaneseq
    %v484 = vshrl.u32 %v483, 7
    %v485 = vsub.s32 0, %v484
    %v486 = vrot.slane %v482, %v485
    %v488 = vsel %vm73, %v476, 0
    %490 = vmatprep.subr.mxu0 0.0
    %491 = vmatpush1.msra.mxu0 0.0
    %492 = vmatprep.subr.mxu0 0.0
    %493 = vmatpush1.msra.mxu0 0.0
    %494 = vmatprep.subr.mxu0 0.0
    %495 = vmatpush1.msra.mxu0 0.0
    %496 = vmatprep.subr.mxu0 0.0
    %497 = vmatpush1.msra.mxu0 0.0
    %498 = vmatprep.subr.mxu0 0.0
    %499 = vmatpush1.msra.mxu0 0.0
    %500 = vmatprep.subr.mxu0 0.0
    %501 = vmatpush1.msra.mxu0 0.0
    %502 = vmatprep.subr.mxu0 0.0
    %503 = vmatpush1.msra.mxu0 0.0
    %504 = vmatprep.subr.mxu0 0.0
    %505 = vmatpush1.msra.mxu0 0.0
    %506 = vmatprep.subr.mxu0 0.0
    %507 = vmatpush1.msra.mxu0 0.0
    %508 = vmatprep.subr.mxu0 0.0
    %509 = vmatpush1.msra.mxu0 0.0
    %510 = vmatprep.subr.mxu0 0.0
    %511 = vmatpush1.msra.mxu0 0.0
    %512 = vmatprep.subr.mxu0 0.0
    %513 = vmatpush1.msra.mxu0 0.0
    %514 = vmatprep.subr.mxu0 0.0
    %515 = vmatpush1.msra.mxu0 %v481
    %516 = vmatprep.subr.mxu0 0.0
    %517 = vmatpush1.msra.mxu0 %v480
    %518 = vmatprep.subr.mxu0 0.0
    %519 = vmatpush1.msra.mxu0 %v479
    %520 = vmatprep.subr.mxu0 0.0
    %521 = vmatpush1.msra.mxu0 %v478
    %522 = vmatprep.subr.mxu0 0.0
    %523 = vmatpush2.msra.mxu0 0.0
    %524 = vmatprep.subr.mxu0 0.0
    %525 = vmatpush2.msra.mxu0 0.0
    %526 = vmatprep.subr.mxu0 0.0
    %527 = vmatpush2.msra.mxu0 0.0
    %528 = vmatprep.subr.mxu0 0.0
    %529 = vmatpush2.msra.mxu0 0.0
    %530 = vmatprep.subr.mxu0 0.0
    %531 = vmatpush2.msra.mxu0 0.0
    %532 = vmatprep.subr.mxu0 0.0
    %533 = vmatpush2.msra.mxu0 0.0
    %534 = vmatprep.subr.mxu0 0.0
    %535 = vmatpush2.msra.mxu0 0.0
    %536 = vmatprep.subr.mxu0 0.0
    %537 = vmatpush2.msra.mxu0 0.0
    %538 = vmatprep.subr.mxu0 0.0
    %539 = vmatpush2.msra.mxu0 0.0
    %540 = vmatprep.subr.mxu0 0.0
    %541 = vmatpush2.msra.mxu0 0.0
    %542 = vmatprep.subr.mxu0 0.0
    %543 = vmatpush2.msra.mxu0 0.0
    %544 = vmatprep.subr.mxu0 0.0
    %545 = vmatpush2.msra.mxu0 0.0
    %546 = vmatprep.subr.mxu0 0.0
    %547 = vmatpush2.msra.mxu0 0.0
    %548 = vmatprep.subr.mxu0 0.0
    %549 = vmatpush2.msra.mxu0 0.0
    %550 = vmatprep.subr.mxu0 0.0
    %551 = vmatpush2.msra.mxu0 0.0
    %552 = vmatprep.subr.mxu0 0.0
    %553 = vmatpush2.msra.mxu0 0.0
    %554 = vmatprep.mubr.f32.mxu0 0.0
    %555 = vmatmul.mubr.f32.gmra.mxu0 %v488
    %v556 = vpop.f32.mrf.mxu0
    %v557 = vadd.f32 %v486, %v556
    %v558 = vpop.f32.mrf.mxu0
    %559 = vdwg.mxu0
    %v560 = vsel %vm73, %v557, 0.0
    %561 = vadd.xlane.f32.xlu0 %v560
    %v562 = vpop.xlane.xlu0 %561
    %v563 = vmul.f32 %v562, %v77
    %v564 = vsub.f32 %v557, %v563
    %v565 = vmul.f32 %v564, %v564
    %v566 = vsel %vm73, %v565, 0.0
    %567 = vadd.xlane.f32.xlu0 %v566
    %v568 = vpop.xlane.xlu0 %567
    %v569 = vmul.f32 %v568, %v77
    %v570 = vadd.f32 %v569, 1e-05
    %v571 = vrsqrt.pop %v570
    %v572 = vmul.f32 %v564, %v571
    %v573 = vmax.f32 %v572, 0.0
    %s574 = scalar_lea.vmem [#allocation8], 64
    %v575 = vld [vmem:[%s574] sm:$0xff]
    %v576 = vld [vmem:[%s574 + $0x8] sm:$0xff]
    %v577 = vld [vmem:[%s574 + $0x10] sm:$0xff]
    %v578 = vld [vmem:[%s574 + $0x18] sm:$0xff]
    %v579 = vld [vmem:[%s4 + $0x2] sm:$0x1]
    %v580 = vlaneseq
    %v581 = vshrl.u32 %v580, 7
    %v582 = vsub.s32 0, %v581
    %v583 = vrot.slane %v579, %v582
    %v585 = vsel %vm73, %v573, 0
    %587 = vmatprep.subr.mxu0 0.0
    %588 = vmatpush1.msra.mxu0 0.0
    %589 = vmatprep.subr.mxu0 0.0
    %590 = vmatpush1.msra.mxu0 0.0
    %591 = vmatprep.subr.mxu0 0.0
    %592 = vmatpush1.msra.mxu0 0.0
    %593 = vmatprep.subr.mxu0 0.0
    %594 = vmatpush1.msra.mxu0 0.0
    %595 = vmatprep.subr.mxu0 0.0
    %596 = vmatpush1.msra.mxu0 0.0
    %597 = vmatprep.subr.mxu0 0.0
    %598 = vmatpush1.msra.mxu0 0.0
    %599 = vmatprep.subr.mxu0 0.0
    %600 = vmatpush1.msra.mxu0 0.0
    %601 = vmatprep.subr.mxu0 0.0
    %602 = vmatpush1.msra.mxu0 0.0
    %603 = vmatprep.subr.mxu0 0.0
    %604 = vmatpush1.msra.mxu0 0.0
    %605 = vmatprep.subr.mxu0 0.0
    %606 = vmatpush1.msra.mxu0 0.0
    %607 = vmatprep.subr.mxu0 0.0
    %608 = vmatpush1.msra.mxu0 0.0
    %609 = vmatprep.subr.mxu0 0.0
    %610 = vmatpush1.msra.mxu0 0.0
    %611 = vmatprep.subr.mxu0 0.0
    %612 = vmatpush1.msra.mxu0 %v578
    %613 = vmatprep.subr.mxu0 0.0
    %614 = vmatpush1.msra.mxu0 %v577
    %615 = vmatprep.subr.mxu0 0.0
    %616 = vmatpush1.msra.mxu0 %v576
    %617 = vmatprep.subr.mxu0 0.0
    %618 = vmatpush1.msra.mxu0 %v575
    %619 = vmatprep.subr.mxu0 0.0
    %620 = vmatpush2.msra.mxu0 0.0
    %621 = vmatprep.subr.mxu0 0.0
    %622 = vmatpush2.msra.mxu0 0.0
    %623 = vmatprep.subr.mxu0 0.0
    %624 = vmatpush2.msra.mxu0 0.0
    %625 = vmatprep.subr.mxu0 0.0
    %626 = vmatpush2.msra.mxu0 0.0
    %627 = vmatprep.subr.mxu0 0.0
    %628 = vmatpush2.msra.mxu0 0.0
    %629 = vmatprep.subr.mxu0 0.0
    %630 = vmatpush2.msra.mxu0 0.0
    %631 = vmatprep.subr.mxu0 0.0
    %632 = vmatpush2.msra.mxu0 0.0
    %633 = vmatprep.subr.mxu0 0.0
    %634 = vmatpush2.msra.mxu0 0.0
    %635 = vmatprep.subr.mxu0 0.0
    %636 = vmatpush2.msra.mxu0 0.0
    %637 = vmatprep.subr.mxu0 0.0
    %638 = vmatpush2.msra.mxu0 0.0
    %639 = vmatprep.subr.mxu0 0.0
    %640 = vmatpush2.msra.mxu0 0.0
    %641 = vmatprep.subr.mxu0 0.0
    %642 = vmatpush2.msra.mxu0 0.0
    %643 = vmatprep.subr.mxu0 0.0
    %644 = vmatpush2.msra.mxu0 0.0
    %645 = vmatprep.subr.mxu0 0.0
    %646 = vmatpush2.msra.mxu0 0.0
    %647 = vmatprep.subr.mxu0 0.0
    %648 = vmatpush2.msra.mxu0 0.0
    %649 = vmatprep.subr.mxu0 0.0
    %650 = vmatpush2.msra.mxu0 0.0
    %651 = vmatprep.mubr.f32.mxu0 0.0
    %652 = vmatmul.mubr.f32.gmra.mxu0 %v585
    %v653 = vpop.f32.mrf.mxu0
    %v654 = vadd.f32 %v583, %v653
    %v655 = vpop.f32.mrf.mxu0
    %656 = vdwg.mxu0
    %v657 = vadd.f32 %v654, %v462
    %658 = vst.msk [vmem:[#allocation10] sm:$0xff] %vm73, %v657
    // Predicated region
    $region38: #{tpu_custom_call.1} parent=1 // pred_check
      _
    $region39: #{tpu_custom_call.1} parent=1 // pred_check_branch
      %660 = sbr.rel (0) target = $region41
    $region40: #{tpu_custom_call.1} parent=1 // pred_region
      %s662 = ssub.s32 128, 128
      %663 = vsyncadd [#allocation4], %s662
      %s665 = sshll.u32 [#allocation10], 4
      %s666 = int_to_ptr.vmem [resolvable:$true] %s665
      %668 = dma.vmem_to_hbm [thread:$0]  %s666, 128, %s5, [#allocation4]
    $region41: #{tpu_custom_call.1} parent=1 // pred_fallthru
      _
    // Predicated region
    $region42: #{tpu_custom_call.1} parent=1 // pred_check
      _
    $region43: #{tpu_custom_call.1} parent=1 // pred_check_branch
      %670 = sbr.rel (0) target = $region45
    $region44: #{tpu_custom_call.1} parent=1 // pred_region
      %671 = dma.done [#allocation4], 128
    $region45: #{tpu_custom_call.1} parent=1 // pred_fallthru
      _
    %672 = vsyncpa [#allocation3], 1
    %673 = vsyncpa [#allocation6], 1
    %674 = vsyncpa [#allocation9], 1
    %675 = vsyncpa [#allocation4], 1

</llo_original>
